<compile_context>
chip_gen: v6e
topology: v6e:2x2x1
jax: 0.10.0
libtpu: 0.0.40
codegen_flags: <defaults>
</compile_context>

<pallas_src>
import functools

import jax
import jax.numpy as jnp
from jax.experimental import pallas as pl
from jax.experimental.pallas import tpu as pltpu


def _attnpool_kernel(x_ref, pos_ref, wq_ref, bq_ref, wk_ref, bk_ref,
                     wv_ref, bv_ref, wc_ref, bc_ref, hsum_ref, hsumt_ref,
                     o_ref, tok_ref, *, num_heads):
    # x_ref    : (1, HW, C)   this batch element's flattened feature map
    # pos_ref  : (L, C)       positional embedding, L = HW + 1
    # w*_ref   : (C, C) / (C, Dout)   pre-transposed projection weights (in, out)
    # b*_ref   : (1, C) / (1, Dout)
    # hsum_ref : (C, nh) one-hot head membership;  hsumt_ref : (nh, C)
    # o_ref    : (1, 1, Dout)
    # tok_ref  : (L, C) f32 VMEM scratch
    x = x_ref[0]                                        # (HW, C)
    hw, c = x.shape
    head_dim = c // num_heads
    scale = float(head_dim) ** -0.5

    pos = pos_ref[...]                                  # (L, C)
    mean = jnp.mean(x, axis=0, keepdims=True)           # (1, C)

    # tokens = concat([mean, x], 0) + pos  — written as two slice stores (no concat temp)
    tok_ref[0:1, :] = mean + pos[0:1, :]
    tok_ref[1:, :] = x + pos[1:, :]
    tokens = tok_ref[...]                               # (L, C)

    q = jnp.dot(tokens[0:1, :], wq_ref[...],
                preferred_element_type=jnp.float32) + bq_ref[...]      # (1, C)
    k = jnp.dot(tokens, wk_ref[...],
                preferred_element_type=jnp.float32) + bk_ref[...]      # (L, C)
    v = jnp.dot(tokens, wv_ref[...],
                preferred_element_type=jnp.float32) + bv_ref[...]      # (L, C)

    # Per-head scores: s[l, h] = scale * sum_{d in head h} q[d] * k[l, d]
    s = jnp.dot(q * k * scale, hsum_ref[...],
                preferred_element_type=jnp.float32)                    # (L, nh)
    m = jnp.max(s, axis=0, keepdims=True)                              # (1, nh)
    p = jnp.exp(s - m)                                                 # (L, nh)
    denom = jnp.sum(p, axis=0, keepdims=True)                          # (1, nh)
    attn = p / denom                                                   # (L, nh)

    # Broadcast per-head weights back onto their channels, weight v, reduce over tokens.
    attn_c = jnp.dot(attn, hsumt_ref[...],
                     preferred_element_type=jnp.float32)               # (L, C)
    ctx = jnp.sum(attn_c * v, axis=0, keepdims=True)                   # (1, C)

    y = jnp.dot(ctx, wc_ref[...],
                preferred_element_type=jnp.float32) + bc_ref[...]      # (1, Dout)
    o_ref[0] = y.astype(o_ref.dtype)


def attention_pool_2d(x, params, num_heads):
    """JAX/Pallas equivalent of AttentionPool2d.forward.

    x: (N, C, H, W); params holds torch-layout weights ((out, in)) and biases.
    Returns (N, Dout).
    """
    x = jnp.asarray(x, jnp.float32)
    N, C, H, W = x.shape
    HW = H * W
    L = HW + 1
    assert C % num_heads == 0, "embed_dim must be divisible by num_heads"
    head_dim = C // num_heads

    pos = jnp.asarray(params["pos"], jnp.float32)               # (L, C)
    wq_t = jnp.asarray(params["wq"], jnp.float32).T             # (C, C)
    wk_t = jnp.asarray(params["wk"], jnp.float32).T
    wv_t = jnp.asarray(params["wv"], jnp.float32).T
    wc_t = jnp.asarray(params["wc"], jnp.float32).T             # (C, Dout)
    bq = jnp.asarray(params["bq"], jnp.float32).reshape(1, C)
    bk = jnp.asarray(params["bk"], jnp.float32).reshape(1, C)
    bv = jnp.asarray(params["bv"], jnp.float32).reshape(1, C)
    Dout = wc_t.shape[1]
    bc = jnp.asarray(params["bc"], jnp.float32).reshape(1, Dout)

    # (N, HW, C): channel dim on the lane axis.
    x_t = jnp.transpose(x.reshape(N, C, HW), (0, 2, 1))

    # One-hot head membership (C, nh) and its transpose (nh, C), built host-side so the
    # kernel needs no in-kernel reshape/transpose of the lane axis.
    head_ids = jnp.arange(C, dtype=jnp.int32) // head_dim
    hsum = (head_ids[:, None] == jnp.arange(num_heads, dtype=jnp.int32)[None, :]
            ).astype(jnp.float32)                               # (C, nh)
    hsum_t = hsum.T                                             # (nh, C)

    const = lambda b: (0, 0)
    out = pl.pallas_call(
        functools.partial(_attnpool_kernel, num_heads=num_heads),
        out_shape=jax.ShapeDtypeStruct((N, 1, Dout), jnp.float32),
        grid=(N,),
        in_specs=[
            pl.BlockSpec((1, HW, C), lambda b: (b, 0, 0)),      # x (per batch element)
            pl.BlockSpec((L, C), const),                        # positional embedding
            pl.BlockSpec((C, C), const),                        # Wq^T
            pl.BlockSpec((1, C), const),                        # bq
            pl.BlockSpec((C, C), const),                        # Wk^T
            pl.BlockSpec((1, C), const),                        # bk
            pl.BlockSpec((C, C), const),                        # Wv^T
            pl.BlockSpec((1, C), const),                        # bv
            pl.BlockSpec((C, Dout), const),                     # Wc^T
            pl.BlockSpec((1, Dout), const),                     # bc
            pl.BlockSpec((C, num_heads), const),                # head membership
            pl.BlockSpec((num_heads, C), const),                # head membership^T
        ],
        out_specs=pl.BlockSpec((1, 1, Dout), lambda b: (b, 0, 0)),
        scratch_shapes=[pltpu.VMEM((L, C), jnp.float32)],
        compiler_params=pltpu.CompilerParams(
            dimension_semantics=("parallel",)),
    )(x_t, pos, wq_t, bq, wk_t, bk, wv_t, bv, wc_t, bc, hsum, hsum_t)
    return out[:, 0, :]                                         # (N, Dout)


def _reference(x, params, num_heads):
    """Pure-JAX reference mirroring F.multi_head_attention_forward semantics."""
    x = jnp.asarray(x, jnp.float32)
    N, C, H, W = x.shape
    head_dim = C // num_heads
    t = jnp.transpose(x.reshape(N, C, H * W), (2, 0, 1))                 # (HW, N, C)
    t = jnp.concatenate([t.mean(axis=0, keepdims=True), t], axis=0)      # (L, N, C)
    t = t + params["pos"][:, None, :]
    q = t[:1] @ params["wq"].T + params["bq"]                            # (1, N, C)
    k = t @ params["wk"].T + params["bk"]                                # (L, N, C)
    v = t @ params["wv"].T + params["bv"]
    L = t.shape[0]
    qh = q.reshape(1, N, num_heads, head_dim)
    kh = k.reshape(L, N, num_heads, head_dim)
    vh = v.reshape(L, N, num_heads, head_dim)
    s = jnp.einsum("qnhd,lnhd->nhql", qh, kh) * (head_dim ** -0.5)
    a = jax.nn.softmax(s, axis=-1)
    o = jnp.einsum("nhql,lnhd->qnhd", a, vh).reshape(1, N, C)
    y = o @ params["wc"].T + params["bc"]                                # (1, N, Dout)
    return y[0]


if __name__ == "__main__":
    key = jax.random.PRNGKey(0)
    spacial_dim = 4          # H = W = 4  ->  HW = 16, L = 17
    embed_dim = 32
    num_heads = 4
    output_dim = 64
    batch = 2

    ks = jax.random.split(key, 10)
    L = spacial_dim * spacial_dim + 1
    params = {
        "pos": jax.random.normal(ks[0], (L, embed_dim), jnp.float32) / embed_dim ** 0.5,
        "wq": 0.1 * jax.random.normal(ks[1], (embed_dim, embed_dim), jnp.float32),
        "bq": 0.1 * jax.random.normal(ks[2], (embed_dim,), jnp.float32),
        "wk": 0.1 * jax.random.normal(ks[3], (embed_dim, embed_dim), jnp.float32),
        "bk": 0.1 * jax.random.normal(ks[4], (embed_dim,), jnp.float32),
        "wv": 0.1 * jax.random.normal(ks[5], (embed_dim, embed_dim), jnp.float32),
        "bv": 0.1 * jax.random.normal(ks[6], (embed_dim,), jnp.float32),
        "wc": 0.1 * jax.random.normal(ks[7], (output_dim, embed_dim), jnp.float32),
        "bc": 0.1 * jax.random.normal(ks[8], (output_dim,), jnp.float32),
    }
    x = jax.random.normal(ks[9], (batch, embed_dim, spacial_dim, spacial_dim),
                          jnp.float32)

    out = jax.block_until_ready(attention_pool_2d(x, params, num_heads))
    ref = _reference(x, params, num_heads)

    assert out.shape == (batch, output_dim), out.shape
    assert jnp.allclose(out, ref, atol=1e-4, rtol=1e-4), \
        float(jnp.max(jnp.abs(out - ref)))

    print("KERNEL_OK")
</pallas_src>

<mosaic_0001>
module attributes {stable_mosaic.version = 11 : i64} {
  func.func @_attnpool_kernel(%arg0: i32, %arg1: memref<1x16x32xf32, #tpu.memory_space<vmem>>, %arg2: memref<17x32xf32, #tpu.memory_space<vmem>>, %arg3: memref<32x32xf32, #tpu.memory_space<vmem>>, %arg4: memref<1x32xf32, #tpu.memory_space<vmem>>, %arg5: memref<32x32xf32, #tpu.memory_space<vmem>>, %arg6: memref<1x32xf32, #tpu.memory_space<vmem>>, %arg7: memref<32x32xf32, #tpu.memory_space<vmem>>, %arg8: memref<1x32xf32, #tpu.memory_space<vmem>>, %arg9: memref<32x64xf32, #tpu.memory_space<vmem>>, %arg10: memref<1x64xf32, #tpu.memory_space<vmem>>, %arg11: memref<32x4xf32, #tpu.memory_space<vmem>>, %arg12: memref<4x32xf32, #tpu.memory_space<vmem>>, %arg13: memref<1x1x64xf32, #tpu.memory_space<vmem>>, %arg14: memref<17x32xf32, #tpu.memory_space<vmem>>) attributes {dimension_semantics = [#tpu.dimension_semantics<parallel>], iteration_bounds = array<i64: 2>, scalar_prefetch = 0 : i64, scratch_operands = 1 : i64, tpu.core_type = #tpu.core_type<tc>, window_params = [{transform_indices = @transform_0, window_bounds = array<i64: 1, 16, 32>}, {pipeline_mode = #tpu.pipeline_mode<synchronous>, transform_indices = @transform_1, window_bounds = array<i64: 17, 32>}, {pipeline_mode = #tpu.pipeline_mode<synchronous>, transform_indices = @transform_2, window_bounds = array<i64: 32, 32>}, {pipeline_mode = #tpu.pipeline_mode<synchronous>, transform_indices = @transform_3, window_bounds = array<i64: 1, 32>}, {pipeline_mode = #tpu.pipeline_mode<synchronous>, transform_indices = @transform_4, window_bounds = array<i64: 32, 32>}, {pipeline_mode = #tpu.pipeline_mode<synchronous>, transform_indices = @transform_5, window_bounds = array<i64: 1, 32>}, {pipeline_mode = #tpu.pipeline_mode<synchronous>, transform_indices = @transform_6, window_bounds = array<i64: 32, 32>}, {pipeline_mode = #tpu.pipeline_mode<synchronous>, transform_indices = @transform_7, window_bounds = array<i64: 1, 32>}, {pipeline_mode = #tpu.pipeline_mode<synchronous>, transform_indices = @transform_8, window_bounds = array<i64: 32, 64>}, {pipeline_mode = #tpu.pipeline_mode<synchronous>, transform_indices = @transform_9, window_bounds = array<i64: 1, 64>}, {pipeline_mode = #tpu.pipeline_mode<synchronous>, transform_indices = @transform_10, window_bounds = array<i64: 32, 4>}, {pipeline_mode = #tpu.pipeline_mode<synchronous>, transform_indices = @transform_11, window_bounds = array<i64: 4, 32>}, {transform_indices = @transform_12, window_bounds = array<i64: 1, 1, 64>}]} {
    %c0 = arith.constant 0 : index
    %c0_0 = arith.constant 0 : index
    %c0_1 = arith.constant 0 : index
    %0 = vector.load %arg1[%c0, %c0_0, %c0_1] : memref<1x16x32xf32, #tpu.memory_space<vmem>>, vector<1x16x32xf32>
    %1 = vector.shape_cast %0 : vector<1x16x32xf32> to vector<16x32xf32>
    %c0_2 = arith.constant 0 : index
    %c0_3 = arith.constant 0 : index
    %2 = vector.load %arg2[%c0_2, %c0_3] : memref<17x32xf32, #tpu.memory_space<vmem>>, vector<17x32xf32>
    %cst = arith.constant dense<0.000000e+00> : vector<32xf32>
    %3 = vector.multi_reduction <add>, %1, %cst [0] : vector<16x32xf32> to vector<32xf32>
    %4 = vector.shape_cast %3 : vector<32xf32> to vector<1x32xf32>
    %cst_4 = arith.constant 1.600000e+01 : f32
    %5 = vector.broadcast %cst_4 : f32 to vector<1x32xf32>
    %6 = arith.divf %4, %5 : vector<1x32xf32>
    %7 = vector.extract_strided_slice %2 {offsets = [0, 0], sizes = [1, 32], strides = [1, 1]} : vector<17x32xf32> to vector<1x32xf32>
    %8 = arith.addf %6, %7 : vector<1x32xf32>
    %c0_5 = arith.constant 0 : index
    %c0_6 = arith.constant 0 : index
    %9 = vector.load %arg14[%c0_5, %c0_6] : memref<17x32xf32, #tpu.memory_space<vmem>>, vector<1x32xf32>
    tpu.vector_store %arg14[%c0_5, %c0_6], %8 {strides = array<i32>} : memref<17x32xf32, #tpu.memory_space<vmem>>, vector<1x32xf32>,
    %10 = vector.extract_strided_slice %2 {offsets = [1, 0], sizes = [16, 32], strides = [1, 1]} : vector<17x32xf32> to vector<16x32xf32>
    %11 = arith.addf %1, %10 : vector<16x32xf32>
    %c1 = arith.constant 1 : index
    %c0_7 = arith.constant 0 : index
    %12 = vector.load %arg14[%c1, %c0_7] : memref<17x32xf32, #tpu.memory_space<vmem>>, vector<16x32xf32>
    tpu.vector_store %arg14[%c1, %c0_7], %11 {strides = array<i32>} : memref<17x32xf32, #tpu.memory_space<vmem>>, vector<16x32xf32>,
    %c0_8 = arith.constant 0 : index
    %c0_9 = arith.constant 0 : index
    %13 = vector.load %arg14[%c0_8, %c0_9] : memref<17x32xf32, #tpu.memory_space<vmem>>, vector<17x32xf32>
    %14 = vector.extract_strided_slice %13 {offsets = [0, 0], sizes = [1, 32], strides = [1, 1]} : vector<17x32xf32> to vector<1x32xf32>
    %c0_10 = arith.constant 0 : index
    %c0_11 = arith.constant 0 : index
    %15 = vector.load %arg3[%c0_10, %c0_11] : memref<32x32xf32, #tpu.memory_space<vmem>>, vector<32x32xf32>
    %cst_12 = arith.constant dense<0.000000e+00> : vector<1x32xf32>
    %16 = tpu.matmul %14, %15, %cst_12 {dimension_numbers = #tpu.dot_dimension_numbers<[1], [0], [0], [1], [0, 0, 1, 1], [], []>} : vector<1x32xf32>, vector<32x32xf32>, vector<1x32xf32> -> vector<1x32xf32>
    %c0_13 = arith.constant 0 : index
    %c0_14 = arith.constant 0 : index
    %17 = vector.load %arg4[%c0_13, %c0_14] : memref<1x32xf32, #tpu.memory_space<vmem>>, vector<1x32xf32>
    %18 = arith.addf %16, %17 : vector<1x32xf32>
    %c0_15 = arith.constant 0 : index
    %c0_16 = arith.constant 0 : index
    %19 = vector.load %arg5[%c0_15, %c0_16] : memref<32x32xf32, #tpu.memory_space<vmem>>, vector<32x32xf32>
    %cst_17 = arith.constant dense<0.000000e+00> : vector<17x32xf32>
    %20 = tpu.matmul %13, %19, %cst_17 {dimension_numbers = #tpu.dot_dimension_numbers<[1], [0], [0], [1], [0, 0, 1, 1], [], []>} : vector<17x32xf32>, vector<32x32xf32>, vector<17x32xf32> -> vector<17x32xf32>
    %c0_18 = arith.constant 0 : index
    %c0_19 = arith.constant 0 : index
    %21 = vector.load %arg6[%c0_18, %c0_19] : memref<1x32xf32, #tpu.memory_space<vmem>>, vector<1x32xf32>
    %22 = vector.broadcast %21 : vector<1x32xf32> to vector<17x32xf32>
    %23 = arith.addf %20, %22 : vector<17x32xf32>
    %c0_20 = arith.constant 0 : index
    %c0_21 = arith.constant 0 : index
    %24 = vector.load %arg7[%c0_20, %c0_21] : memref<32x32xf32, #tpu.memory_space<vmem>>, vector<32x32xf32>
    %cst_22 = arith.constant dense<0.000000e+00> : vector<17x32xf32>
    %25 = tpu.matmul %13, %24, %cst_22 {dimension_numbers = #tpu.dot_dimension_numbers<[1], [0], [0], [1], [0, 0, 1, 1], [], []>} : vector<17x32xf32>, vector<32x32xf32>, vector<17x32xf32> -> vector<17x32xf32>
    %c0_23 = arith.constant 0 : index
    %c0_24 = arith.constant 0 : index
    %26 = vector.load %arg8[%c0_23, %c0_24] : memref<1x32xf32, #tpu.memory_space<vmem>>, vector<1x32xf32>
    %27 = vector.broadcast %26 : vector<1x32xf32> to vector<17x32xf32>
    %28 = arith.addf %25, %27 : vector<17x32xf32>
    %29 = vector.broadcast %18 : vector<1x32xf32> to vector<17x32xf32>
    %30 = arith.mulf %29, %23 : vector<17x32xf32>
    %cst_25 = arith.constant 0.353553385 : f32
    %31 = vector.broadcast %cst_25 : f32 to vector<17x32xf32>
    %32 = arith.mulf %30, %31 : vector<17x32xf32>
    %c0_26 = arith.constant 0 : index
    %c0_27 = arith.constant 0 : index
    %33 = vector.load %arg11[%c0_26, %c0_27] : memref<32x4xf32, #tpu.memory_space<vmem>>, vector<32x4xf32>
    %cst_28 = arith.constant dense<0.000000e+00> : vector<17x4xf32>
    %34 = tpu.matmul %32, %33, %cst_28 {dimension_numbers = #tpu.dot_dimension_numbers<[1], [0], [0], [1], [0, 0, 1, 1], [], []>} : vector<17x32xf32>, vector<32x4xf32>, vector<17x4xf32> -> vector<17x4xf32>
    %cst_29 = arith.constant dense<0xFF800000> : vector<4xf32>
    %35 = vector.multi_reduction <maximumf>, %34, %cst_29 [0] : vector<17x4xf32> to vector<4xf32>
    %36 = vector.shape_cast %35 : vector<4xf32> to vector<1x4xf32>
    %37 = vector.broadcast %36 : vector<1x4xf32> to vector<17x4xf32>
    %38 = arith.subf %34, %37 : vector<17x4xf32>
    %39 = math.exp %38 : vector<17x4xf32>
    %cst_30 = arith.constant dense<0.000000e+00> : vector<4xf32>
    %40 = vector.multi_reduction <add>, %39, %cst_30 [0] : vector<17x4xf32> to vector<4xf32>
    %41 = vector.shape_cast %40 : vector<4xf32> to vector<1x4xf32>
    %42 = vector.broadcast %41 : vector<1x4xf32> to vector<17x4xf32>
    %43 = arith.divf %39, %42 : vector<17x4xf32>
    %c0_31 = arith.constant 0 : index
    %c0_32 = arith.constant 0 : index
    %44 = vector.load %arg12[%c0_31, %c0_32] : memref<4x32xf32, #tpu.memory_space<vmem>>, vector<4x32xf32>
    %cst_33 = arith.constant dense<0.000000e+00> : vector<17x32xf32>
    %45 = tpu.matmul %43, %44, %cst_33 {dimension_numbers = #tpu.dot_dimension_numbers<[1], [0], [0], [1], [0, 0, 1, 1], [], []>} : vector<17x4xf32>, vector<4x32xf32>, vector<17x32xf32> -> vector<17x32xf32>
    %46 = arith.mulf %45, %28 : vector<17x32xf32>
    %cst_34 = arith.constant dense<0.000000e+00> : vector<32xf32>
    %47 = vector.multi_reduction <add>, %46, %cst_34 [0] : vector<17x32xf32> to vector<32xf32>
    %48 = vector.shape_cast %47 : vector<32xf32> to vector<1x32xf32>
    %c0_35 = arith.constant 0 : index
    %c0_36 = arith.constant 0 : index
    %49 = vector.load %arg9[%c0_35, %c0_36] : memref<32x64xf32, #tpu.memory_space<vmem>>, vector<32x64xf32>
    %cst_37 = arith.constant dense<0.000000e+00> : vector<1x64xf32>
    %50 = tpu.matmul %48, %49, %cst_37 {dimension_numbers = #tpu.dot_dimension_numbers<[1], [0], [0], [1], [0, 0, 1, 1], [], []>} : vector<1x32xf32>, vector<32x64xf32>, vector<1x64xf32> -> vector<1x64xf32>
    %c0_38 = arith.constant 0 : index
    %c0_39 = arith.constant 0 : index
    %51 = vector.load %arg10[%c0_38, %c0_39] : memref<1x64xf32, #tpu.memory_space<vmem>>, vector<1x64xf32>
    %52 = arith.addf %50, %51 : vector<1x64xf32>
    %c0_40 = arith.constant 0 : index
    %c0_41 = arith.constant 0 : index
    %c0_42 = arith.constant 0 : index
    %53 = vector.load %arg13[%c0_40, %c0_41, %c0_42] : memref<1x1x64xf32, #tpu.memory_space<vmem>>, vector<1x1x64xf32>
    %54 = vector.shape_cast %53 : vector<1x1x64xf32> to vector<1x64xf32>
    %55 = vector.shape_cast %52 : vector<1x64xf32> to vector<1x1x64xf32>
    tpu.vector_store %arg13[%c0_40, %c0_41, %c0_42], %55 {strides = array<i32>} : memref<1x1x64xf32, #tpu.memory_space<vmem>>, vector<1x1x64xf32>,
    return
  }
  func.func @transform_0(%arg0: i32) -> (i32, i32, i32) {
    %c0_i32 = arith.constant 0 : i32
    %c0_i32_0 = arith.constant 0 : i32
    %c0_i32_1 = arith.constant 0 : i32
    return %arg0, %c0_i32, %c0_i32_0 : i32, i32, i32
  }
  func.func @transform_1(%arg0: i32) -> (i32, i32) {
    %c0_i32 = arith.constant 0 : i32
    %c0_i32_0 = arith.constant 0 : i32
    %c0_i32_1 = arith.constant 0 : i32
    return %c0_i32, %c0_i32_0 : i32, i32
  }
  func.func @transform_2(%arg0: i32) -> (i32, i32) {
    %c0_i32 = arith.constant 0 : i32
    %c0_i32_0 = arith.constant 0 : i32
    %c0_i32_1 = arith.constant 0 : i32
    return %c0_i32, %c0_i32_0 : i32, i32
  }
  func.func @transform_3(%arg0: i32) -> (i32, i32) {
    %c0_i32 = arith.constant 0 : i32
    %c0_i32_0 = arith.constant 0 : i32
    %c0_i32_1 = arith.constant 0 : i32
    return %c0_i32, %c0_i32_0 : i32, i32
  }
  func.func @transform_4(%arg0: i32) -> (i32, i32) {
    %c0_i32 = arith.constant 0 : i32
    %c0_i32_0 = arith.constant 0 : i32
    %c0_i32_1 = arith.constant 0 : i32
    return %c0_i32, %c0_i32_0 : i32, i32
  }
  func.func @transform_5(%arg0: i32) -> (i32, i32) {
    %c0_i32 = arith.constant 0 : i32
    %c0_i32_0 = arith.constant 0 : i32
    %c0_i32_1 = arith.constant 0 : i32
    return %c0_i32, %c0_i32_0 : i32, i32
  }
  func.func @transform_6(%arg0: i32) -> (i32, i32) {
    %c0_i32 = arith.constant 0 : i32
    %c0_i32_0 = arith.constant 0 : i32
    %c0_i32_1 = arith.constant 0 : i32
    return %c0_i32, %c0_i32_0 : i32, i32
  }
  func.func @transform_7(%arg0: i32) -> (i32, i32) {
    %c0_i32 = arith.constant 0 : i32
    %c0_i32_0 = arith.constant 0 : i32
    %c0_i32_1 = arith.constant 0 : i32
    return %c0_i32, %c0_i32_0 : i32, i32
  }
  func.func @transform_8(%arg0: i32) -> (i32, i32) {
    %c0_i32 = arith.constant 0 : i32
    %c0_i32_0 = arith.constant 0 : i32
    %c0_i32_1 = arith.constant 0 : i32
    return %c0_i32, %c0_i32_0 : i32, i32
  }
  func.func @transform_9(%arg0: i32) -> (i32, i32) {
    %c0_i32 = arith.constant 0 : i32
    %c0_i32_0 = arith.constant 0 : i32
    %c0_i32_1 = arith.constant 0 : i32
    return %c0_i32, %c0_i32_0 : i32, i32
  }
  func.func @transform_10(%arg0: i32) -> (i32, i32) {
    %c0_i32 = arith.constant 0 : i32
    %c0_i32_0 = arith.constant 0 : i32
    %c0_i32_1 = arith.constant 0 : i32
    return %c0_i32, %c0_i32_0 : i32, i32
  }
  func.func @transform_11(%arg0: i32) -> (i32, i32) {
    %c0_i32 = arith.constant 0 : i32
    %c0_i32_0 = arith.constant 0 : i32
    %c0_i32_1 = arith.constant 0 : i32
    return %c0_i32, %c0_i32_0 : i32, i32
  }
  func.func @transform_12(%arg0: i32) -> (i32, i32, i32) {
    %c0_i32 = arith.constant 0 : i32
    %c0_i32_0 = arith.constant 0 : i32
    %c0_i32_1 = arith.constant 0 : i32
    return %arg0, %c0_i32, %c0_i32_0 : i32, i32, i32
  }
}

</mosaic_0001>

<llo_original>
// kernel: tpu_custom_call.1
$region0: #{tpu_custom_call.1}
  #allocation0 [shape = 'u32[]', space=smem, size = 0x4, offset = 0x4, fixed_abs, tag = 'smem constant byte address 0x4 - core index']
  #allocation1 [shape = 'u32[144,128]{1,0:T(1,128)}', space=vmem, size = 0x12000, scoped, tag = 'internal scratch']
  #allocation2 [shape = 'f32[17,32]{1,0:T(8,128)}', space=vmem, size = 0x3000, scoped, tag = 'scratch operand']
  %s0 = inlined_call_operand.vmem [shape: f32[2,16,32], index: 0, kind: input, shape index: {}]
  %s1 = inlined_call_operand.hbm [shape: f32[17,32], index: 1, kind: input, shape index: {}]
  %s2 = inlined_call_operand.hbm [shape: f32[32,32], index: 2, kind: input, shape index: {}]
  %s3 = inlined_call_operand.vmem [shape: f32[1,32], index: 3, kind: input, shape index: {}]
  %s4 = inlined_call_operand.hbm [shape: f32[32,32], index: 4, kind: input, shape index: {}]
  %s5 = inlined_call_operand.vmem [shape: f32[1,32], index: 5, kind: input, shape index: {}]
  %s6 = inlined_call_operand.hbm [shape: f32[32,32], index: 6, kind: input, shape index: {}]
  %s7 = inlined_call_operand.vmem [shape: f32[1,32], index: 7, kind: input, shape index: {}]
  %s8 = inlined_call_operand.hbm [shape: f32[32,64], index: 8, kind: input, shape index: {}]
  %s9 = inlined_call_operand.vmem [shape: f32[1,64], index: 9, kind: input, shape index: {}]
  %s10 = inlined_call_operand.vmem [shape: f32[32,4], index: 10, kind: input, shape index: {}]
  %s11 = inlined_call_operand.vmem [shape: f32[4,32], index: 11, kind: input, shape index: {}]
  %s12 = inlined_call_operand.hbm [shape: f32[2,1,64], index: 12, kind: output, shape index: {}]
  %s13 = sld [smem:[#allocation0]]
  $region101: #{tpu_custom_call.1} parent=0
    _
  %s15 = ssub.s32 1, %s13
  %s16 = scalar_select 0, %s15, %s13
  $region1: #{tpu_custom_call.1} parent=0
    #allocation3 [shape = 'u8[12288]{0}', space=vmem, size = 0x3000, scoped, tag = 'input window, operand 1, single buffered']
    #allocation4 [shape = 's32[2]{0}', space=sflag, size = 0x8, scoped, tag = 'scoped memory for tpu_custom_call.1']
    #allocation5 [shape = 's32[2]{0}', space=sflag, size = 0x8, scoped, tag = 'scoped memory for tpu_custom_call.1']
    #allocation6 [shape = 'u8[16384]{0}', space=vmem, size = 0x4000, scoped, tag = 'input window, operand 2, single buffered']
    #allocation7 [shape = 's32[1]{0}', space=sflag, size = 0x4, scoped, tag = 'scoped memory for tpu_custom_call.1']
    #allocation8 [shape = 'u8[16384]{0}', space=vmem, size = 0x4000, scoped, tag = 'input window, operand 4, single buffered']
    #allocation9 [shape = 'u8[16384]{0}', space=vmem, size = 0x4000, scoped, tag = 'input window, operand 6, single buffered']
    #allocation10 [shape = 's32[1]{0}', space=sflag, size = 0x4, scoped, tag = 'scoped memory for tpu_custom_call.1']
    #allocation11 [shape = 'u8[16384]{0}', space=vmem, size = 0x4000, scoped, tag = 'input window, operand 8, single buffered']
    #allocation12 [shape = 'u8[1024]{0}', space=vmem, size = 0x400, scoped, tag = 'output window, operand 0']
    %17 = vsyncpa [#allocation4], 0
    %18 = vsyncpa [#allocation7], 0
    %19 = vsyncpa [#allocation10], 0
    %20 = vsyncpa [#allocation5], 0
    %s21 = scalar_lea.sflag [#allocation5], 1
    %22 = vsyncpa %s21, 0
    loop: start=0, step=1, limit=4
    $region2: #{tpu_custom_call.1} parent=1 // loop_pre_header
      _
    $region3: #{tpu_custom_call.1} parent=1 // loop_header
      %s24 = sphi 0, %s28
      %p25 = scmp.ge.s32.totalorder %s24, 4
      %s34 = sphi 0, %s36
      %s37 = sphi 0, %s34
      %s38 = sphi 0, %s37
      %s54 = sphi 0, %s38
      %s58 = sphi 0, %s58
      %s60 = sphi 0, %s58
      %s61 = sphi 0, %s60
      %s75 = sphi 0, %s61
      %s79 = sphi 0, %s79
      %s81 = sphi 0, %s79
      %s82 = sphi 0, %s81
      %s96 = sphi 0, %s82
      %s100 = sphi 0, %s100
      %s102 = sphi 0, %s100
      %s103 = sphi 0, %s102
      %s117 = sphi 0, %s103
      %s121 = sphi 0, %s121
      %s123 = sphi 0, %s121
      %s124 = sphi 0, %s123
      %s138 = sphi 0, %s124
      %s142 = sphi 0, %s142
      %s144 = sphi 0, %s142
      %s145 = sphi 0, %s144
      %s159 = sphi 0, %s145
      %s163 = sphi 0, %s163
      %s165 = sphi 0, %s163
      %s166 = sphi 0, %s165
      %s180 = sphi 0, %s166
      %s184 = sphi 0, %s184
      %s186 = sphi 0, %s184
      %s187 = sphi 0, %s186
      %s201 = sphi 0, %s187
      %s205 = sphi 0, %s205
      %s207 = sphi 0, %s205
      %s208 = sphi 0, %s207
      %s222 = sphi 0, %s208
      %s226 = sphi 0, %s226
      %s228 = sphi 0, %s226
      %s229 = sphi 0, %s228
      %s243 = sphi 0, %s229
      %s247 = sphi 0, %s247
      %s249 = sphi 0, %s247
      %s250 = sphi 0, %s249
      %s264 = sphi 0, %s250
      %s268 = sphi 0, %s268
      %s270 = sphi 0, %s268
      %s271 = sphi 0, %s270
      %s285 = sphi 0, %s271
      %s291 = sphi 0, %s293
      %s294 = sphi 0, %s291
      %s295 = sphi 0, %s294
      %s311 = sphi 0, %s295
    $region4: #{tpu_custom_call.1} parent=1 // loop_header_branch
      %27 = sbr.rel (%p25) target = $region8
    $region5: #{tpu_custom_call.1} parent=1 // loop_body
      %s29 = ssub.s32 %s24, 1
      %s30 = ssub.s32 %s24, 2
      %s31 = sadd.s32 %s24, 1
      %s32 = ssub.s32 %s24, %s31
      %p33 = scmp.eq.s32.totalorder %s32, 0
      %s35 = sadd.s32 %s34, 1
      %s36 = scalar_select %p33, %s34, %s35
      %p39 = pneg %p33
      %p40 = scmp.eq.s32.totalorder %s24, 1
      %p41 = por %p39, %p40
      %p42 = scmp.ne.s32.totalorder %s34, %s37
      %p43 = scmp.eq.s32.totalorder %s24, 0
      %p44 = por %p42, %p43
      %p45 = scmp.ne.s32.totalorder %s34, %s37
      %p46 = scmp.eq.s32.totalorder %s29, 1
      %p47 = por %p45, %p46
      %p48 = scmp.ne.s32.totalorder %s37, %s38
      %p49 = scmp.eq.s32.totalorder %s29, 0
      %p50 = por %p48, %p49
      %p51 = scmp.ne.s32.totalorder %s37, %s38
      %p52 = scmp.eq.s32.totalorder %s30, 1
      %p53 = por %p51, %p52
      %p55 = scmp.ne.s32.totalorder %s38, %s54
      %p56 = scmp.eq.s32.totalorder %s30, 0
      %p57 = por %p55, %p56
      %s59 = sadd.s32 %s58, 1
      %p62 = scmp.eq.s32.totalorder %s24, 1
      %p63 = scmp.ne.s32.totalorder %s58, %s60
      %p64 = scmp.eq.s32.totalorder %s24, 0
      %p65 = por %p63, %p64
      %p66 = scmp.ne.s32.totalorder %s58, %s60
      %p67 = scmp.eq.s32.totalorder %s29, 1
      %p68 = por %p66, %p67
      %p69 = scmp.ne.s32.totalorder %s60, %s61
      %p70 = scmp.eq.s32.totalorder %s29, 0
      %p71 = por %p69, %p70
      %p72 = scmp.ne.s32.totalorder %s60, %s61
      %p73 = scmp.eq.s32.totalorder %s30, 1
      %p74 = por %p72, %p73
      %p76 = scmp.ne.s32.totalorder %s61, %s75
      %p77 = scmp.eq.s32.totalorder %s30, 0
      %p78 = por %p76, %p77
      %s80 = sadd.s32 %s79, 1
      %p83 = scmp.eq.s32.totalorder %s24, 1
      %p84 = scmp.ne.s32.totalorder %s79, %s81
      %p85 = scmp.eq.s32.totalorder %s24, 0
      %p86 = por %p84, %p85
      %p87 = scmp.ne.s32.totalorder %s79, %s81
      %p88 = scmp.eq.s32.totalorder %s29, 1
      %p89 = por %p87, %p88
      %p90 = scmp.ne.s32.totalorder %s81, %s82
      %p91 = scmp.eq.s32.totalorder %s29, 0
      %p92 = por %p90, %p91
      %p93 = scmp.ne.s32.totalorder %s81, %s82
      %p94 = scmp.eq.s32.totalorder %s30, 1
      %p95 = por %p93, %p94
      %p97 = scmp.ne.s32.totalorder %s82, %s96
      %p98 = scmp.eq.s32.totalorder %s30, 0
      %p99 = por %p97, %p98
      %s101 = sadd.s32 %s100, 1
      %p104 = scmp.eq.s32.totalorder %s24, 1
      %p105 = scmp.ne.s32.totalorder %s100, %s102
      %p106 = scmp.eq.s32.totalorder %s24, 0
      %p107 = por %p105, %p106
      %p108 = scmp.ne.s32.totalorder %s100, %s102
      %p109 = scmp.eq.s32.totalorder %s29, 1
      %p110 = por %p108, %p109
      %p111 = scmp.ne.s32.totalorder %s102, %s103
      %p112 = scmp.eq.s32.totalorder %s29, 0
      %p113 = por %p111, %p112
      %p114 = scmp.ne.s32.totalorder %s102, %s103
      %p115 = scmp.eq.s32.totalorder %s30, 1
      %p116 = por %p114, %p115
      %p118 = scmp.ne.s32.totalorder %s103, %s117
      %p119 = scmp.eq.s32.totalorder %s30, 0
      %p120 = por %p118, %p119
      %s122 = sadd.s32 %s121, 1
      %p125 = scmp.eq.s32.totalorder %s24, 1
      %p126 = scmp.ne.s32.totalorder %s121, %s123
      %p127 = scmp.eq.s32.totalorder %s24, 0
      %p128 = por %p126, %p127
      %p129 = scmp.ne.s32.totalorder %s121, %s123
      %p130 = scmp.eq.s32.totalorder %s29, 1
      %p131 = por %p129, %p130
      %p132 = scmp.ne.s32.totalorder %s123, %s124
      %p133 = scmp.eq.s32.totalorder %s29, 0
      %p134 = por %p132, %p133
      %p135 = scmp.ne.s32.totalorder %s123, %s124
      %p136 = scmp.eq.s32.totalorder %s30, 1
      %p137 = por %p135, %p136
      %p139 = scmp.ne.s32.totalorder %s124, %s138
      %p140 = scmp.eq.s32.totalorder %s30, 0
      %p141 = por %p139, %p140
      %s143 = sadd.s32 %s142, 1
      %p146 = scmp.eq.s32.totalorder %s24, 1
      %p147 = scmp.ne.s32.totalorder %s142, %s144
      %p148 = scmp.eq.s32.totalorder %s24, 0
      %p149 = por %p147, %p148
      %p150 = scmp.ne.s32.totalorder %s142, %s144
      %p151 = scmp.eq.s32.totalorder %s29, 1
      %p152 = por %p150, %p151
      %p153 = scmp.ne.s32.totalorder %s144, %s145
      %p154 = scmp.eq.s32.totalorder %s29, 0
      %p155 = por %p153, %p154
      %p156 = scmp.ne.s32.totalorder %s144, %s145
      %p157 = scmp.eq.s32.totalorder %s30, 1
      %p158 = por %p156, %p157
      %p160 = scmp.ne.s32.totalorder %s145, %s159
      %p161 = scmp.eq.s32.totalorder %s30, 0
      %p162 = por %p160, %p161
      %s164 = sadd.s32 %s163, 1
      %p167 = scmp.eq.s32.totalorder %s24, 1
      %p168 = scmp.ne.s32.totalorder %s163, %s165
      %p169 = scmp.eq.s32.totalorder %s24, 0
      %p170 = por %p168, %p169
      %p171 = scmp.ne.s32.totalorder %s163, %s165
      %p172 = scmp.eq.s32.totalorder %s29, 1
      %p173 = por %p171, %p172
      %p174 = scmp.ne.s32.totalorder %s165, %s166
      %p175 = scmp.eq.s32.totalorder %s29, 0
      %p176 = por %p174, %p175
      %p177 = scmp.ne.s32.totalorder %s165, %s166
      %p178 = scmp.eq.s32.totalorder %s30, 1
      %p179 = por %p177, %p178
      %p181 = scmp.ne.s32.totalorder %s166, %s180
      %p182 = scmp.eq.s32.totalorder %s30, 0
      %p183 = por %p181, %p182
      %s185 = sadd.s32 %s184, 1
      %p188 = scmp.eq.s32.totalorder %s24, 1
      %p189 = scmp.ne.s32.totalorder %s184, %s186
      %p190 = scmp.eq.s32.totalorder %s24, 0
      %p191 = por %p189, %p190
      %p192 = scmp.ne.s32.totalorder %s184, %s186
      %p193 = scmp.eq.s32.totalorder %s29, 1
      %p194 = por %p192, %p193
      %p195 = scmp.ne.s32.totalorder %s186, %s187
      %p196 = scmp.eq.s32.totalorder %s29, 0
      %p197 = por %p195, %p196
      %p198 = scmp.ne.s32.totalorder %s186, %s187
      %p199 = scmp.eq.s32.totalorder %s30, 1
      %p200 = por %p198, %p199
      %p202 = scmp.ne.s32.totalorder %s187, %s201
      %p203 = scmp.eq.s32.totalorder %s30, 0
      %p204 = por %p202, %p203
      %s206 = sadd.s32 %s205, 1
      %p209 = scmp.eq.s32.totalorder %s24, 1
      %p210 = scmp.ne.s32.totalorder %s205, %s207
      %p211 = scmp.eq.s32.totalorder %s24, 0
      %p212 = por %p210, %p211
      %p213 = scmp.ne.s32.totalorder %s205, %s207
      %p214 = scmp.eq.s32.totalorder %s29, 1
      %p215 = por %p213, %p214
      %p216 = scmp.ne.s32.totalorder %s207, %s208
      %p217 = scmp.eq.s32.totalorder %s29, 0
      %p218 = por %p216, %p217
      %p219 = scmp.ne.s32.totalorder %s207, %s208
      %p220 = scmp.eq.s32.totalorder %s30, 1
      %p221 = por %p219, %p220
      %p223 = scmp.ne.s32.totalorder %s208, %s222
      %p224 = scmp.eq.s32.totalorder %s30, 0
      %p225 = por %p223, %p224
      %s227 = sadd.s32 %s226, 1
      %p230 = scmp.eq.s32.totalorder %s24, 1
      %p231 = scmp.ne.s32.totalorder %s226, %s228
      %p232 = scmp.eq.s32.totalorder %s24, 0
      %p233 = por %p231, %p232
      %p234 = scmp.ne.s32.totalorder %s226, %s228
      %p235 = scmp.eq.s32.totalorder %s29, 1
      %p236 = por %p234, %p235
      %p237 = scmp.ne.s32.totalorder %s228, %s229
      %p238 = scmp.eq.s32.totalorder %s29, 0
      %p239 = por %p237, %p238
      %p240 = scmp.ne.s32.totalorder %s228, %s229
      %p241 = scmp.eq.s32.totalorder %s30, 1
      %p242 = por %p240, %p241
      %p244 = scmp.ne.s32.totalorder %s229, %s243
      %p245 = scmp.eq.s32.totalorder %s30, 0
      %p246 = por %p244, %p245
      %s248 = sadd.s32 %s247, 1
      %p251 = scmp.eq.s32.totalorder %s24, 1
      %p252 = scmp.ne.s32.totalorder %s247, %s249
      %p253 = scmp.eq.s32.totalorder %s24, 0
      %p254 = por %p252, %p253
      %p255 = scmp.ne.s32.totalorder %s247, %s249
      %p256 = scmp.eq.s32.totalorder %s29, 1
      %p257 = por %p255, %p256
      %p258 = scmp.ne.s32.totalorder %s249, %s250
      %p259 = scmp.eq.s32.totalorder %s29, 0
      %p260 = por %p258, %p259
      %p261 = scmp.ne.s32.totalorder %s249, %s250
      %p262 = scmp.eq.s32.totalorder %s30, 1
      %p263 = por %p261, %p262
      %p265 = scmp.ne.s32.totalorder %s250, %s264
      %p266 = scmp.eq.s32.totalorder %s30, 0
      %p267 = por %p265, %p266
      %s269 = sadd.s32 %s268, 1
      %p272 = scmp.eq.s32.totalorder %s24, 1
      %p273 = scmp.ne.s32.totalorder %s268, %s270
      %p274 = scmp.eq.s32.totalorder %s24, 0
      %p275 = por %p273, %p274
      %p276 = scmp.ne.s32.totalorder %s268, %s270
      %p277 = scmp.eq.s32.totalorder %s29, 1
      %p278 = por %p276, %p277
      %p279 = scmp.ne.s32.totalorder %s270, %s271
      %p280 = scmp.eq.s32.totalorder %s29, 0
      %p281 = por %p279, %p280
      %p282 = scmp.ne.s32.totalorder %s270, %s271
      %p283 = scmp.eq.s32.totalorder %s30, 1
      %p284 = por %p282, %p283
      %p286 = scmp.ne.s32.totalorder %s271, %s285
      %p287 = scmp.eq.s32.totalorder %s30, 0
      %p288 = por %p286, %p287
      %s289 = ssub.s32 %s24, %s31
      %p290 = scmp.eq.s32.totalorder %s289, 0
      %s292 = sadd.s32 %s291, 1
      %s293 = scalar_select %p290, %s291, %s292
      %p296 = pneg %p290
      %p297 = scmp.eq.s32.totalorder %s24, 1
      %p298 = por %p296, %p297
      %p299 = scmp.ne.s32.totalorder %s291, %s294
      %p300 = scmp.eq.s32.totalorder %s24, 0
      %p301 = por %p299, %p300
      %p302 = scmp.ne.s32.totalorder %s291, %s294
      %p303 = scmp.eq.s32.totalorder %s29, 1
      %p304 = por %p302, %p303
      %p305 = scmp.ne.s32.totalorder %s294, %s295
      %p306 = scmp.eq.s32.totalorder %s29, 0
      %p307 = por %p305, %p306
      %p308 = scmp.ne.s32.totalorder %s294, %s295
      %p309 = scmp.eq.s32.totalorder %s30, 1
      %p310 = por %p308, %p309
      %p312 = scmp.ne.s32.totalorder %s295, %s311
      %p313 = scmp.eq.s32.totalorder %s30, 0
      %p314 = por %p312, %p313
      %p315 = scmp.le.s32.totalorder 1, %s24
      %p316 = scmp.lt.s32.totalorder %s24, 3
      %p317 = pnand %p315, %p316
      %p318 = pneg %p317
      // Predicated region
      $region9: #{tpu_custom_call.1} parent=5 // pred_check
        _
      $region10: #{tpu_custom_call.1} parent=5 // pred_check_branch
        %320 = sbr.rel (%p317) target = $region12
      $region11: #{tpu_custom_call.1} parent=5 // pred_region
        %s321 = ssub.s32 %s24, 1
        // Predicated region
        $region13: #{tpu_custom_call.1} parent=11 // pred_check
          %p322 = pneg %p71
        $region14: #{tpu_custom_call.1} parent=11 // pred_check_branch
          %324 = sbr.rel (%p322) target = $region16
        $region15: #{tpu_custom_call.1} parent=11 // pred_region
          %s326 = ssub.s32 384, 384
          %327 = vsyncadd [#allocation4], %s326
          %s328 = sshll.u32 [#allocation3], 4
          %s329 = int_to_ptr.vmem [resolvable:$true] %s328
          %334 = dma.hbm_to_vmem [thread:$0]  %s1, 384, %s329, [#allocation4], 128, 128, 8
        $region16: #{tpu_custom_call.1} parent=11 // pred_fallthru
          _
        // Predicated region
        $region17: #{tpu_custom_call.1} parent=11 // pred_check
          %p335 = pneg %p92
        $region18: #{tpu_custom_call.1} parent=11 // pred_check_branch
          %337 = sbr.rel (%p335) target = $region20
        $region19: #{tpu_custom_call.1} parent=11 // pred_region
          %s339 = ssub.s32 512, 512
          %340 = vsyncadd [#allocation7], %s339
          %s341 = sshll.u32 [#allocation6], 4
          %s342 = int_to_ptr.vmem [resolvable:$true] %s341
          %347 = dma.hbm_to_vmem [thread:$0]  %s2, 512, %s342, [#allocation7], 128, 128, 8
        $region20: #{tpu_custom_call.1} parent=11 // pred_fallthru
          _
        // Predicated region
        $region21: #{tpu_custom_call.1} parent=11 // pred_check
          %p348 = pneg %p113
        $region22: #{tpu_custom_call.1} parent=11 // pred_check_branch
          %350 = sbr.rel (%p348) target = $region24
        $region23: #{tpu_custom_call.1} parent=11 // pred_region
          _
        $region24: #{tpu_custom_call.1} parent=11 // pred_fallthru
          _
        // Predicated region
        $region25: #{tpu_custom_call.1} parent=11 // pred_check
          %p351 = pneg %p134
        $region26: #{tpu_custom_call.1} parent=11 // pred_check_branch
          %353 = sbr.rel (%p351) target = $region28
        $region27: #{tpu_custom_call.1} parent=11 // pred_region
          %s355 = ssub.s32 512, 512
          %356 = vsyncadd [#allocation7], %s355
          %s357 = sshll.u32 [#allocation8], 4
          %s358 = int_to_ptr.vmem [resolvable:$true] %s357
          %363 = dma.hbm_to_vmem [thread:$0]  %s4, 512, %s358, [#allocation7], 128, 128, 8
        $region28: #{tpu_custom_call.1} parent=11 // pred_fallthru
          _
        // Predicated region
        $region29: #{tpu_custom_call.1} parent=11 // pred_check
          %p364 = pneg %p155
        $region30: #{tpu_custom_call.1} parent=11 // pred_check_branch
          %366 = sbr.rel (%p364) target = $region32
        $region31: #{tpu_custom_call.1} parent=11 // pred_region
          _
        $region32: #{tpu_custom_call.1} parent=11 // pred_fallthru
          _
        // Predicated region
        $region33: #{tpu_custom_call.1} parent=11 // pred_check
          %p367 = pneg %p176
        $region34: #{tpu_custom_call.1} parent=11 // pred_check_branch
          %369 = sbr.rel (%p367) target = $region36
        $region35: #{tpu_custom_call.1} parent=11 // pred_region
          %s371 = ssub.s32 512, 512
          %372 = vsyncadd [#allocation10], %s371
          %s373 = sshll.u32 [#allocation9], 4
          %s374 = int_to_ptr.vmem [resolvable:$true] %s373
          %379 = dma.hbm_to_vmem [thread:$0]  %s6, 512, %s374, [#allocation10], 128, 128, 8
        $region36: #{tpu_custom_call.1} parent=11 // pred_fallthru
          _
        // Predicated region
        $region37: #{tpu_custom_call.1} parent=11 // pred_check
          %p380 = pneg %p197
        $region38: #{tpu_custom_call.1} parent=11 // pred_check_branch
          %382 = sbr.rel (%p380) target = $region40
        $region39: #{tpu_custom_call.1} parent=11 // pred_region
          _
        $region40: #{tpu_custom_call.1} parent=11 // pred_fallthru
          _
        // Predicated region
        $region41: #{tpu_custom_call.1} parent=11 // pred_check
          %p383 = pneg %p218
        $region42: #{tpu_custom_call.1} parent=11 // pred_check_branch
          %385 = sbr.rel (%p383) target = $region44
        $region43: #{tpu_custom_call.1} parent=11 // pred_region
          %s387 = ssub.s32 512, 512
          %388 = vsyncadd [#allocation10], %s387
          %s389 = sshll.u32 [#allocation11], 4
          %s390 = int_to_ptr.vmem [resolvable:$true] %s389
          %395 = dma.hbm_to_vmem [thread:$0]  %s8, 512, %s390, [#allocation10], 128, 128, 8
        $region44: #{tpu_custom_call.1} parent=11 // pred_fallthru
          _
        // Predicated region
        $region45: #{tpu_custom_call.1} parent=11 // pred_check
          %p396 = pneg %p239
        $region46: #{tpu_custom_call.1} parent=11 // pred_check_branch
          %398 = sbr.rel (%p396) target = $region48
        $region47: #{tpu_custom_call.1} parent=11 // pred_region
          _
        $region48: #{tpu_custom_call.1} parent=11 // pred_fallthru
          _
        // Predicated region
        $region49: #{tpu_custom_call.1} parent=11 // pred_check
          %p399 = pneg %p260
        $region50: #{tpu_custom_call.1} parent=11 // pred_check_branch
          %401 = sbr.rel (%p399) target = $region52
        $region51: #{tpu_custom_call.1} parent=11 // pred_region
          _
        $region52: #{tpu_custom_call.1} parent=11 // pred_fallthru
          _
        // Predicated region
        $region53: #{tpu_custom_call.1} parent=11 // pred_check
          %p402 = pneg %p281
        $region54: #{tpu_custom_call.1} parent=11 // pred_check_branch
          %404 = sbr.rel (%p402) target = $region56
        $region55: #{tpu_custom_call.1} parent=11 // pred_region
          _
        $region56: #{tpu_custom_call.1} parent=11 // pred_fallthru
          _
      $region12: #{tpu_custom_call.1} parent=5 // pred_fallthru
        _
      %p405 = scmp.lt.s32.totalorder %s24, 2
      // Predicated region
      $region57: #{tpu_custom_call.1} parent=5 // pred_check
        %p406 = pneg %p405
      $region58: #{tpu_custom_call.1} parent=5 // pred_check_branch
        %408 = sbr.rel (%p406) target = $region60
      $region59: #{tpu_custom_call.1} parent=5 // pred_region
        // Predicated region
        $region61: #{tpu_custom_call.1} parent=59 // pred_check
          %p409 = pneg %p44
        $region62: #{tpu_custom_call.1} parent=59 // pred_check_branch
          %411 = sbr.rel (%p409) target = $region64
        $region63: #{tpu_custom_call.1} parent=59 // pred_region
          %p412 = scmp.lt.s32.totalorder %s24, 1
          %s413 = scalar_select %p412, %s24, 1
          %s414 = smul.addr %s413, 2
          %s415 = smul.addr %s414, 8
          %s416 = scalar_lea.vmem %s0, %s415
        $region64: #{tpu_custom_call.1} parent=59 // pred_fallthru
          _
      $region60: #{tpu_custom_call.1} parent=5 // pred_fallthru
        _
      %p417 = scmp.le.s32.totalorder 1, %s24
      %p418 = scmp.lt.s32.totalorder %s24, 3
      %p419 = pnand %p417, %p418
      %p420 = pneg %p419
      // Predicated region
      $region65: #{tpu_custom_call.1} parent=5 // pred_check
        _
      $region66: #{tpu_custom_call.1} parent=5 // pred_check_branch
        %422 = sbr.rel (%p419) target = $region68
      $region67: #{tpu_custom_call.1} parent=5 // pred_region
        %s423 = ssub.s32 %s24, 1
        // Predicated region
        $region69: #{tpu_custom_call.1} parent=67 // pred_check
          %p424 = pneg %p71
        $region70: #{tpu_custom_call.1} parent=67 // pred_check_branch
          %426 = sbr.rel (%p424) target = $region72
        $region71: #{tpu_custom_call.1} parent=67 // pred_region
          %427 = dma.done [#allocation4], 384
        $region72: #{tpu_custom_call.1} parent=67 // pred_fallthru
          _
        // Predicated region
        $region73: #{tpu_custom_call.1} parent=67 // pred_check
          %p428 = pneg %p92
        $region74: #{tpu_custom_call.1} parent=67 // pred_check_branch
          %430 = sbr.rel (%p428) target = $region76
        $region75: #{tpu_custom_call.1} parent=67 // pred_region
          %431 = dma.done [#allocation7], 512
        $region76: #{tpu_custom_call.1} parent=67 // pred_fallthru
          _
        // Predicated region
        $region77: #{tpu_custom_call.1} parent=67 // pred_check
          %p432 = pneg %p134
        $region78: #{tpu_custom_call.1} parent=67 // pred_check_branch
          %434 = sbr.rel (%p432) target = $region80
        $region79: #{tpu_custom_call.1} parent=67 // pred_region
          %435 = dma.done [#allocation7], 512
        $region80: #{tpu_custom_call.1} parent=67 // pred_fallthru
          _
        // Predicated region
        $region81: #{tpu_custom_call.1} parent=67 // pred_check
          %p436 = pneg %p176
        $region82: #{tpu_custom_call.1} parent=67 // pred_check_branch
          %438 = sbr.rel (%p436) target = $region84
        $region83: #{tpu_custom_call.1} parent=67 // pred_region
          %439 = dma.done [#allocation10], 512
        $region84: #{tpu_custom_call.1} parent=67 // pred_fallthru
          _
        // Predicated region
        $region85: #{tpu_custom_call.1} parent=67 // pred_check
          %p440 = pneg %p218
        $region86: #{tpu_custom_call.1} parent=67 // pred_check_branch
          %442 = sbr.rel (%p440) target = $region88
        $region87: #{tpu_custom_call.1} parent=67 // pred_region
          %443 = dma.done [#allocation10], 512
        $region88: #{tpu_custom_call.1} parent=67 // pred_fallthru
          _
        %p444 = scmp.lt.s32.totalorder %s29, 1
        %s445 = scalar_select %p444, %s29, 1
        %s446 = smul.addr %s445, 2
        %s447 = smul.addr %s446, 8
        %s448 = scalar_lea.vmem %s0, %s447
        %p449 = pneg %p50
        %p450 = pneg %p47
        %p451 = pneg %p71
        %p452 = pneg %p68
        %p453 = pneg %p92
        %p454 = pneg %p89
        %p455 = pneg %p113
        %p456 = pneg %p110
        %p457 = pneg %p134
        %p458 = pneg %p131
        %p459 = pneg %p155
        %p460 = pneg %p152
        %p461 = pneg %p176
        %p462 = pneg %p173
        %p463 = pneg %p197
        %p464 = pneg %p194
        %p465 = pneg %p218
        %p466 = pneg %p215
        %p467 = pneg %p239
        %p468 = pneg %p236
        %p469 = pneg %p260
        %p470 = pneg %p257
        %p471 = pneg %p281
        %p472 = pneg %p278
        %p473 = pneg %p307
        %p474 = pneg %p304
        %s475 = sand.u32 %s294, 1
        %s476 = scalar_lea.sflag [#allocation5], %s475
        %s477 = sand.u32 %s294, 1
        %s478 = scalar_lea.vmem [#allocation12], %s477
        %p479 = scmp.lt.s32.totalorder %s29, 1
        %s480 = scalar_select %p479, %s29, 1
        %s481 = smul.addr %s480, 2
        %s482 = smul.addr %s481, 8
        %s483 = scalar_lea.vmem %s0, %s482
        %v484 = vld [vmem:[%s483] sm:$0xff]
        %v485 = vld [vmem:[%s483 + $0x8] sm:$0xff]
        %v486 = vld [vmem:[#allocation3] sm:$0xff]
        %v487 = vld [vmem:[#allocation3 + $0x8] sm:$0xff]
        %v488 = vld [vmem:[#allocation3 + $0x10] sm:$0x1]
        %vm489 = vcmask 261120
        %v490 = vsel %vm489, %v484, 0.0
        %v491 = vsel %vm489, %v485, 0.0
        %v492 = vadd.f32 %v490, %v491
        %v493 = vrot.slane %v492, 4
        %v494 = vadd.f32 %v492, %v493
        %v495 = vrot.slane %v494, 2
        %v496 = vadd.f32 %v494, %v495
        %v497 = vrot.slane %v496, 1
        %v498 = vadd.f32 %v496, %v497
        %v499 = vrcp.pop 16.0
        %v500 = vmul.f32 %v498, %v499
        %v501 = vadd.f32 %v500, %v486
        %vm502 = vcmask 253952
        %503 = vst.msk [vmem:[#allocation2] sm:$0x1] %vm502, %v501
        %vm507 = vcmask 1046528
        %v508 = vrot.slane %v486, 1
        %v509 = vrot.slane %v487, 1
        %v510 = vsel %vm507, %v508, %v509
        %v511 = vrot.slane %v488, 1
        %v512 = vsel %vm507, %v509, %v511
        %v515 = vadd.f32 %v484, %v510
        %v516 = vadd.f32 %v485, %v512
        %517 = vst.msk [vmem:[#allocation2 + $0x1] sm:$0xff] %vm489, %v515
        %518 = vst.msk [vmem:[#allocation2 + $0x9] sm:$0xff] %vm489, %v516
        %v519 = vld [vmem:[#allocation2] sm:$0xff]
        %v520 = vld [vmem:[#allocation2 + $0x8] sm:$0xff]
        %v521 = vld [vmem:[#allocation2 + $0x10] sm:$0x1]
        %v522 = vld [vmem:[#allocation6] sm:$0xff]
        %v523 = vld [vmem:[#allocation6 + $0x8] sm:$0xff]
        %v524 = vld [vmem:[#allocation6 + $0x10] sm:$0xff]
        %v525 = vld [vmem:[#allocation6 + $0x18] sm:$0xff]
        %v526 = vld [vmem:[%s3] sm:$0x1]
        %v528 = vsel %vm489, %v519, 0
        %530 = vmatprep.subr.mxu0 0.0
        %531 = vmatpush1.msra.mxu0 0.0
        %532 = vmatprep.subr.mxu0 0.0
        %533 = vmatpush1.msra.mxu0 0.0
        %534 = vmatprep.subr.mxu0 0.0
        %535 = vmatpush1.msra.mxu0 0.0
        %536 = vmatprep.subr.mxu0 0.0
        %537 = vmatpush1.msra.mxu0 0.0
        %538 = vmatprep.subr.mxu0 0.0
        %539 = vmatpush1.msra.mxu0 0.0
        %540 = vmatprep.subr.mxu0 0.0
        %541 = vmatpush1.msra.mxu0 0.0
        %542 = vmatprep.subr.mxu0 0.0
        %543 = vmatpush1.msra.mxu0 0.0
        %544 = vmatprep.subr.mxu0 0.0
        %545 = vmatpush1.msra.mxu0 0.0
        %546 = vmatprep.subr.mxu0 0.0
        %547 = vmatpush1.msra.mxu0 0.0
        %548 = vmatprep.subr.mxu0 0.0
        %549 = vmatpush1.msra.mxu0 0.0
        %550 = vmatprep.subr.mxu0 0.0
        %551 = vmatpush1.msra.mxu0 0.0
        %552 = vmatprep.subr.mxu0 0.0
        %553 = vmatpush1.msra.mxu0 0.0
        %554 = vmatprep.subr.mxu0 0.0
        %555 = vmatpush1.msra.mxu0 %v525
        %556 = vmatprep.subr.mxu0 0.0
        %557 = vmatpush1.msra.mxu0 %v524
        %558 = vmatprep.subr.mxu0 0.0
        %559 = vmatpush1.msra.mxu0 %v523
        %560 = vmatprep.subr.mxu0 0.0
        %561 = vmatpush1.msra.mxu0 %v522
        %562 = vmatprep.subr.mxu0 0.0
        %563 = vmatpush2.msra.mxu0 0.0
        %564 = vmatprep.subr.mxu0 0.0
        %565 = vmatpush2.msra.mxu0 0.0
        %566 = vmatprep.subr.mxu0 0.0
        %567 = vmatpush2.msra.mxu0 0.0
        %568 = vmatprep.subr.mxu0 0.0
        %569 = vmatpush2.msra.mxu0 0.0
        %570 = vmatprep.subr.mxu0 0.0
        %571 = vmatpush2.msra.mxu0 0.0
        %572 = vmatprep.subr.mxu0 0.0
        %573 = vmatpush2.msra.mxu0 0.0
        %574 = vmatprep.subr.mxu0 0.0
        %575 = vmatpush2.msra.mxu0 0.0
        %576 = vmatprep.subr.mxu0 0.0
        %577 = vmatpush2.msra.mxu0 0.0
        %578 = vmatprep.subr.mxu0 0.0
        %579 = vmatpush2.msra.mxu0 0.0
        %580 = vmatprep.subr.mxu0 0.0
        %581 = vmatpush2.msra.mxu0 0.0
        %582 = vmatprep.subr.mxu0 0.0
        %583 = vmatpush2.msra.mxu0 0.0
        %584 = vmatprep.subr.mxu0 0.0
        %585 = vmatpush2.msra.mxu0 0.0
        %586 = vmatprep.subr.mxu0 0.0
        %587 = vmatpush2.msra.mxu0 0.0
        %588 = vmatprep.subr.mxu0 0.0
        %589 = vmatpush2.msra.mxu0 0.0
        %590 = vmatprep.subr.mxu0 0.0
        %591 = vmatpush2.msra.mxu0 0.0
        %592 = vmatprep.subr.mxu0 0.0
        %593 = vmatpush2.msra.mxu0 0.0
        %594 = vmatprep.mubr.f32.mxu0 0.0
        %595 = vmatmul.mubr.f32.gmra.mxu0 %v528
        %v596 = vpop.f32.mrf.mxu0
        %v597 = vadd.f32 %v526, %v596
        %v598 = vpop.f32.mrf.mxu0
        %599 = vdwg.mxu0
        %v600 = vld [vmem:[#allocation8] sm:$0xff]
        %v601 = vld [vmem:[#allocation8 + $0x8] sm:$0xff]
        %v602 = vld [vmem:[#allocation8 + $0x10] sm:$0xff]
        %v603 = vld [vmem:[#allocation8 + $0x18] sm:$0xff]
        %v604 = vld [vmem:[%s5] sm:$0x1]
        %v606 = vlaneseq
        %v607 = vshrl.u32 %v606, 7
        %v608 = vsub.s32 0, %v607
        %v609 = vrot.slane %v604, %v608
        %v612 = vsel %vm489, %v520, 0
        %v615 = vsel %vm489, %v521, 0
        %617 = vmatprep.subr.mxu0 0.0
        %618 = vmatpush1.msra.mxu0 0.0
        %619 = vmatprep.subr.mxu0 0.0
        %620 = vmatpush1.msra.mxu0 0.0
        %621 = vmatprep.subr.mxu0 0.0
        %622 = vmatpush1.msra.mxu0 0.0
        %623 = vmatprep.subr.mxu0 0.0
        %624 = vmatpush1.msra.mxu0 0.0
        %625 = vmatprep.subr.mxu0 0.0
        %626 = vmatpush1.msra.mxu0 0.0
        %627 = vmatprep.subr.mxu0 0.0
        %628 = vmatpush1.msra.mxu0 0.0
        %629 = vmatprep.subr.mxu0 0.0
        %630 = vmatpush1.msra.mxu0 0.0
        %631 = vmatprep.subr.mxu0 0.0
        %632 = vmatpush1.msra.mxu0 0.0
        %633 = vmatprep.subr.mxu0 0.0
        %634 = vmatpush1.msra.mxu0 0.0
        %635 = vmatprep.subr.mxu0 0.0
        %636 = vmatpush1.msra.mxu0 0.0
        %637 = vmatprep.subr.mxu0 0.0
        %638 = vmatpush1.msra.mxu0 0.0
        %639 = vmatprep.subr.mxu0 0.0
        %640 = vmatpush1.msra.mxu0 0.0
        %641 = vmatprep.subr.mxu0 0.0
        %642 = vmatpush1.msra.mxu0 %v603
        %643 = vmatprep.subr.mxu0 0.0
        %644 = vmatpush1.msra.mxu0 %v602
        %645 = vmatprep.subr.mxu0 0.0
        %646 = vmatpush1.msra.mxu0 %v601
        %647 = vmatprep.subr.mxu0 0.0
        %648 = vmatpush1.msra.mxu0 %v600
        %649 = vmatprep.subr.mxu0 0.0
        %650 = vmatpush2.msra.mxu0 0.0
        %651 = vmatprep.subr.mxu0 0.0
        %652 = vmatpush2.msra.mxu0 0.0
        %653 = vmatprep.subr.mxu0 0.0
        %654 = vmatpush2.msra.mxu0 0.0
        %655 = vmatprep.subr.mxu0 0.0
        %656 = vmatpush2.msra.mxu0 0.0
        %657 = vmatprep.subr.mxu0 0.0
        %658 = vmatpush2.msra.mxu0 0.0
        %659 = vmatprep.subr.mxu0 0.0
        %660 = vmatpush2.msra.mxu0 0.0
        %661 = vmatprep.subr.mxu0 0.0
        %662 = vmatpush2.msra.mxu0 0.0
        %663 = vmatprep.subr.mxu0 0.0
        %664 = vmatpush2.msra.mxu0 0.0
        %665 = vmatprep.subr.mxu0 0.0
        %666 = vmatpush2.msra.mxu0 0.0
        %667 = vmatprep.subr.mxu0 0.0
        %668 = vmatpush2.msra.mxu0 0.0
        %669 = vmatprep.subr.mxu0 0.0
        %670 = vmatpush2.msra.mxu0 0.0
        %671 = vmatprep.subr.mxu0 0.0
        %672 = vmatpush2.msra.mxu0 0.0
        %673 = vmatprep.subr.mxu0 0.0
        %674 = vmatpush2.msra.mxu0 0.0
        %675 = vmatprep.subr.mxu0 0.0
        %676 = vmatpush2.msra.mxu0 0.0
        %677 = vmatprep.subr.mxu0 0.0
        %678 = vmatpush2.msra.mxu0 0.0
        %679 = vmatprep.subr.mxu0 0.0
        %680 = vmatpush2.msra.mxu0 0.0
        %681 = vmatprep.mubr.f32.mxu0 0.0
        %682 = vmatmul.mubr.f32.gmra.mxu0 %v528
        %v683 = vpop.f32.mrf.mxu0
        %v684 = vadd.f32 %v609, %v683
        %v685 = vpop.f32.mrf.mxu0
        %686 = vmatprep.mubr.f32.mxu0 0.0
        %687 = vmatmul.mubr.f32.gmra.mxu0 %v612
        %v688 = vpop.f32.mrf.mxu0
        %v689 = vadd.f32 %v609, %v688
        %v690 = vpop.f32.mrf.mxu0
        %691 = vmatprep.mubr.f32.mxu0 0.0
        %692 = vmatmul.mubr.f32.gmra.mxu0 %v615
        %v693 = vpop.f32.mrf.mxu0
        %v694 = vadd.f32 %v609, %v693
        %v695 = vpop.f32.mrf.mxu0
        %696 = vdwg.mxu0
        %v697 = vld [vmem:[#allocation9] sm:$0xff]
        %v698 = vld [vmem:[#allocation9 + $0x8] sm:$0xff]
        %v699 = vld [vmem:[#allocation9 + $0x10] sm:$0xff]
        %v700 = vld [vmem:[#allocation9 + $0x18] sm:$0xff]
        %v701 = vld [vmem:[%s7] sm:$0x1]
        %v703 = vlaneseq
        %v704 = vshrl.u32 %v703, 7
        %v705 = vsub.s32 0, %v704
        %v706 = vrot.slane %v701, %v705
        %708 = vmatprep.subr.mxu0 0.0
        %709 = vmatpush1.msra.mxu0 0.0
        %710 = vmatprep.subr.mxu0 0.0
        %711 = vmatpush1.msra.mxu0 0.0
        %712 = vmatprep.subr.mxu0 0.0
        %713 = vmatpush1.msra.mxu0 0.0
        %714 = vmatprep.subr.mxu0 0.0
        %715 = vmatpush1.msra.mxu0 0.0
        %716 = vmatprep.subr.mxu0 0.0
        %717 = vmatpush1.msra.mxu0 0.0
        %718 = vmatprep.subr.mxu0 0.0
        %719 = vmatpush1.msra.mxu0 0.0
        %720 = vmatprep.subr.mxu0 0.0
        %721 = vmatpush1.msra.mxu0 0.0
        %722 = vmatprep.subr.mxu0 0.0
        %723 = vmatpush1.msra.mxu0 0.0
        %724 = vmatprep.subr.mxu0 0.0
        %725 = vmatpush1.msra.mxu0 0.0
        %726 = vmatprep.subr.mxu0 0.0
        %727 = vmatpush1.msra.mxu0 0.0
        %728 = vmatprep.subr.mxu0 0.0
        %729 = vmatpush1.msra.mxu0 0.0
        %730 = vmatprep.subr.mxu0 0.0
        %731 = vmatpush1.msra.mxu0 0.0
        %732 = vmatprep.subr.mxu0 0.0
        %733 = vmatpush1.msra.mxu0 %v700
        %734 = vmatprep.subr.mxu0 0.0
        %735 = vmatpush1.msra.mxu0 %v699
        %736 = vmatprep.subr.mxu0 0.0
        %737 = vmatpush1.msra.mxu0 %v698
        %738 = vmatprep.subr.mxu0 0.0
        %739 = vmatpush1.msra.mxu0 %v697
        %740 = vmatprep.subr.mxu0 0.0
        %741 = vmatpush2.msra.mxu0 0.0
        %742 = vmatprep.subr.mxu0 0.0
        %743 = vmatpush2.msra.mxu0 0.0
        %744 = vmatprep.subr.mxu0 0.0
        %745 = vmatpush2.msra.mxu0 0.0
        %746 = vmatprep.subr.mxu0 0.0
        %747 = vmatpush2.msra.mxu0 0.0
        %748 = vmatprep.subr.mxu0 0.0
        %749 = vmatpush2.msra.mxu0 0.0
        %750 = vmatprep.subr.mxu0 0.0
        %751 = vmatpush2.msra.mxu0 0.0
        %752 = vmatprep.subr.mxu0 0.0
        %753 = vmatpush2.msra.mxu0 0.0
        %754 = vmatprep.subr.mxu0 0.0
        %755 = vmatpush2.msra.mxu0 0.0
        %756 = vmatprep.subr.mxu0 0.0
        %757 = vmatpush2.msra.mxu0 0.0
        %758 = vmatprep.subr.mxu0 0.0
        %759 = vmatpush2.msra.mxu0 0.0
        %760 = vmatprep.subr.mxu0 0.0
        %761 = vmatpush2.msra.mxu0 0.0
        %762 = vmatprep.subr.mxu0 0.0
        %763 = vmatpush2.msra.mxu0 0.0
        %764 = vmatprep.subr.mxu0 0.0
        %765 = vmatpush2.msra.mxu0 0.0
        %766 = vmatprep.subr.mxu0 0.0
        %767 = vmatpush2.msra.mxu0 0.0
        %768 = vmatprep.subr.mxu0 0.0
        %769 = vmatpush2.msra.mxu0 0.0
        %770 = vmatprep.subr.mxu0 0.0
        %771 = vmatpush2.msra.mxu0 0.0
        %772 = vmatprep.mubr.f32.mxu0 0.0
        %773 = vmatmul.mubr.f32.gmra.mxu0 %v528
        %v774 = vpop.f32.mrf.mxu0
        %v775 = vadd.f32 %v706, %v774
        %v776 = vpop.f32.mrf.mxu0
        %777 = vmatprep.mubr.f32.mxu0 0.0
        %778 = vmatmul.mubr.f32.gmra.mxu0 %v612
        %v779 = vpop.f32.mrf.mxu0
        %v780 = vadd.f32 %v706, %v779
        %v781 = vpop.f32.mrf.mxu0
        %782 = vmatprep.mubr.f32.mxu0 0.0
        %783 = vmatmul.mubr.f32.gmra.mxu0 %v615
        %v784 = vpop.f32.mrf.mxu0
        %v785 = vadd.f32 %v706, %v784
        %v786 = vpop.f32.mrf.mxu0
        %787 = vdwg.mxu0
        %v788 = vlaneseq
        %v789 = vshrl.u32 %v788, 7
        %v790 = vsub.s32 0, %v789
        %v791 = vrot.slane %v597, %v790
        %v792 = vmul.f32 %v791, %v684
        %v793 = vmul.f32 %v791, %v689
        %v794 = vmul.f32 %v791, %v694
        %v795 = vmul.f32 %v792, 0.35355338
        %v796 = vmul.f32 %v793, 0.35355338
        %v797 = vmul.f32 %v794, 0.35355338
        %v798 = vld [vmem:[%s10] sm:$0xff]
        %v799 = vld [vmem:[%s10 + $0x8] sm:$0xff]
        %v800 = vld [vmem:[%s10 + $0x10] sm:$0xff]
        %v801 = vld [vmem:[%s10 + $0x18] sm:$0xff]
        %v803 = vsel %vm489, %v795, 0
        %v806 = vsel %vm489, %v796, 0
        %v809 = vsel %vm489, %v797, 0
        %811 = vmatprep.subr.mxu0 0.0
        %812 = vmatpush1.msra.mxu0 0.0
        %813 = vmatprep.subr.mxu0 0.0
        %814 = vmatpush1.msra.mxu0 0.0
        %815 = vmatprep.subr.mxu0 0.0
        %816 = vmatpush1.msra.mxu0 0.0
        %817 = vmatprep.subr.mxu0 0.0
        %818 = vmatpush1.msra.mxu0 0.0
        %819 = vmatprep.subr.mxu0 0.0
        %820 = vmatpush1.msra.mxu0 0.0
        %821 = vmatprep.subr.mxu0 0.0
        %822 = vmatpush1.msra.mxu0 0.0
        %823 = vmatprep.subr.mxu0 0.0
        %824 = vmatpush1.msra.mxu0 0.0
        %825 = vmatprep.subr.mxu0 0.0
        %826 = vmatpush1.msra.mxu0 0.0
        %827 = vmatprep.subr.mxu0 0.0
        %828 = vmatpush1.msra.mxu0 0.0
        %829 = vmatprep.subr.mxu0 0.0
        %830 = vmatpush1.msra.mxu0 0.0
        %831 = vmatprep.subr.mxu0 0.0
        %832 = vmatpush1.msra.mxu0 0.0
        %833 = vmatprep.subr.mxu0 0.0
        %834 = vmatpush1.msra.mxu0 0.0
        %835 = vmatprep.subr.mxu0 0.0
        %836 = vmatpush1.msra.mxu0 %v801
        %837 = vmatprep.subr.mxu0 0.0
        %838 = vmatpush1.msra.mxu0 %v800
        %839 = vmatprep.subr.mxu0 0.0
        %840 = vmatpush1.msra.mxu0 %v799
        %841 = vmatprep.subr.mxu0 0.0
        %842 = vmatpush1.msra.mxu0 %v798
        %843 = vmatprep.subr.mxu0 0.0
        %844 = vmatpush2.msra.mxu0 0.0
        %845 = vmatprep.subr.mxu0 0.0
        %846 = vmatpush2.msra.mxu0 0.0
        %847 = vmatprep.subr.mxu0 0.0
        %848 = vmatpush2.msra.mxu0 0.0
        %849 = vmatprep.subr.mxu0 0.0
        %850 = vmatpush2.msra.mxu0 0.0
        %851 = vmatprep.subr.mxu0 0.0
        %852 = vmatpush2.msra.mxu0 0.0
        %853 = vmatprep.subr.mxu0 0.0
        %854 = vmatpush2.msra.mxu0 0.0
        %855 = vmatprep.subr.mxu0 0.0
        %856 = vmatpush2.msra.mxu0 0.0
        %857 = vmatprep.subr.mxu0 0.0
        %858 = vmatpush2.msra.mxu0 0.0
        %859 = vmatprep.subr.mxu0 0.0
        %860 = vmatpush2.msra.mxu0 0.0
        %861 = vmatprep.subr.mxu0 0.0
        %862 = vmatpush2.msra.mxu0 0.0
        %863 = vmatprep.subr.mxu0 0.0
        %864 = vmatpush2.msra.mxu0 0.0
        %865 = vmatprep.subr.mxu0 0.0
        %866 = vmatpush2.msra.mxu0 0.0
        %867 = vmatprep.subr.mxu0 0.0
        %868 = vmatpush2.msra.mxu0 0.0
        %869 = vmatprep.subr.mxu0 0.0
        %870 = vmatpush2.msra.mxu0 0.0
        %871 = vmatprep.subr.mxu0 0.0
        %872 = vmatpush2.msra.mxu0 0.0
        %873 = vmatprep.subr.mxu0 0.0
        %874 = vmatpush2.msra.mxu0 0.0
        %875 = vmatprep.mubr.f32.mxu0 0.0
        %876 = vmatmul.mubr.f32.gmra.mxu0 %v803
        %v877 = vpop.f32.mrf.mxu0
        %v878 = vadd.f32 0.0, %v877
        %v879 = vpop.f32.mrf.mxu0
        %880 = vmatprep.mubr.f32.mxu0 0.0
        %881 = vmatmul.mubr.f32.gmra.mxu0 %v806
        %v882 = vpop.f32.mrf.mxu0
        %v883 = vadd.f32 0.0, %v882
        %v884 = vpop.f32.mrf.mxu0
        %885 = vmatprep.mubr.f32.mxu0 0.0
        %886 = vmatmul.mubr.f32.gmra.mxu0 %v809
        %v887 = vpop.f32.mrf.mxu0
        %v888 = vadd.f32 0.0, %v887
        %v889 = vpop.f32.mrf.mxu0
        %890 = vdwg.mxu0
        %vm891 = vcmask 31744
        %v892 = vsel %vm891, %v878, -inf
        %v893 = vsel %vm891, %v883, -inf
        %vm894 = vcmask 24576
        %v895 = vsel %vm894, %v888, -inf
        %v896 = vmax.f32 %v892, %v893
        %v897 = vmax.f32 %v896, %v895
        %v898 = vrot.slane %v897, 4
        %v899 = vmax.f32 %v897, %v898
        %v900 = vrot.slane %v899, 2
        %v901 = vmax.f32 %v899, %v900
        %v902 = vrot.slane %v901, 1
        %v903 = vmax.f32 %v901, %v902
        %v904 = vsub.f32 %v878, %v903
        %v905 = vsub.f32 %v883, %v903
        %v906 = vsub.f32 %v888, %v903
        %v907 = vmul.f32 %v904, 1.442695
        %v908 = vpow.pop %v907
        %v909 = vmul.f32 %v905, 1.442695
        %v910 = vpow.pop %v909
        %v911 = vmul.f32 %v906, 1.442695
        %v912 = vpow.pop %v911
        %v913 = vsel %vm891, %v908, 0.0
        %v914 = vsel %vm891, %v910, 0.0
        %v915 = vadd.f32 %v913, %v914
        %v916 = vsel %vm894, %v912, 0.0
        %v917 = vadd.f32 %v915, %v916
        %v918 = vrot.slane %v917, 4
        %v919 = vadd.f32 %v917, %v918
        %v920 = vrot.slane %v919, 2
        %v921 = vadd.f32 %v919, %v920
        %v922 = vrot.slane %v921, 1
        %v923 = vadd.f32 %v921, %v922
        %v924 = vrcp.pop %v923
        %v925 = vmul.f32 %v908, %v924
        %v926 = vmul.f32 %v910, %v924
        %v927 = vmul.f32 %v912, %v924
        %v928 = vld [vmem:[%s11] sm:$0xf]
        %v930 = vsel %vm891, %v925, 0
        %v933 = vsel %vm891, %v926, 0
        %v936 = vsel %vm891, %v927, 0
        %vm938 = vcmask 1043456
        %v940 = vsel %vm938, %v928, 0
        %942 = vmatprep.subr.mxu0 0.0
        %943 = vmatpush1.msra.mxu0 0.0
        %944 = vmatprep.subr.mxu0 0.0
        %945 = vmatpush1.msra.mxu0 0.0
        %946 = vmatprep.subr.mxu0 0.0
        %947 = vmatpush1.msra.mxu0 0.0
        %948 = vmatprep.subr.mxu0 0.0
        %949 = vmatpush1.msra.mxu0 0.0
        %950 = vmatprep.subr.mxu0 0.0
        %951 = vmatpush1.msra.mxu0 0.0
        %952 = vmatprep.subr.mxu0 0.0
        %953 = vmatpush1.msra.mxu0 0.0
        %954 = vmatprep.subr.mxu0 0.0
        %955 = vmatpush1.msra.mxu0 0.0
        %956 = vmatprep.subr.mxu0 0.0
        %957 = vmatpush1.msra.mxu0 0.0
        %958 = vmatprep.subr.mxu0 0.0
        %959 = vmatpush1.msra.mxu0 0.0
        %960 = vmatprep.subr.mxu0 0.0
        %961 = vmatpush1.msra.mxu0 0.0
        %962 = vmatprep.subr.mxu0 0.0
        %963 = vmatpush1.msra.mxu0 0.0
        %964 = vmatprep.subr.mxu0 0.0
        %965 = vmatpush1.msra.mxu0 0.0
        %966 = vmatprep.subr.mxu0 0.0
        %967 = vmatpush1.msra.mxu0 0.0
        %968 = vmatprep.subr.mxu0 0.0
        %969 = vmatpush1.msra.mxu0 0.0
        %970 = vmatprep.subr.mxu0 0.0
        %971 = vmatpush1.msra.mxu0 0.0
        %972 = vmatprep.subr.mxu0 0.0
        %973 = vmatpush1.msra.mxu0 %v940
        %974 = vmatprep.subr.mxu0 0.0
        %975 = vmatpush2.msra.mxu0 0.0
        %976 = vmatprep.subr.mxu0 0.0
        %977 = vmatpush2.msra.mxu0 0.0
        %978 = vmatprep.subr.mxu0 0.0
        %979 = vmatpush2.msra.mxu0 0.0
        %980 = vmatprep.subr.mxu0 0.0
        %981 = vmatpush2.msra.mxu0 0.0
        %982 = vmatprep.subr.mxu0 0.0
        %983 = vmatpush2.msra.mxu0 0.0
        %984 = vmatprep.subr.mxu0 0.0
        %985 = vmatpush2.msra.mxu0 0.0
        %986 = vmatprep.subr.mxu0 0.0
        %987 = vmatpush2.msra.mxu0 0.0
        %988 = vmatprep.subr.mxu0 0.0
        %989 = vmatpush2.msra.mxu0 0.0
        %990 = vmatprep.subr.mxu0 0.0
        %991 = vmatpush2.msra.mxu0 0.0
        %992 = vmatprep.subr.mxu0 0.0
        %993 = vmatpush2.msra.mxu0 0.0
        %994 = vmatprep.subr.mxu0 0.0
        %995 = vmatpush2.msra.mxu0 0.0
        %996 = vmatprep.subr.mxu0 0.0
        %997 = vmatpush2.msra.mxu0 0.0
        %998 = vmatprep.subr.mxu0 0.0
        %999 = vmatpush2.msra.mxu0 0.0
        %1000 = vmatprep.subr.mxu0 0.0
        %1001 = vmatpush2.msra.mxu0 0.0
        %1002 = vmatprep.subr.mxu0 0.0
        %1003 = vmatpush2.msra.mxu0 0.0
        %1004 = vmatprep.subr.mxu0 0.0
        %1005 = vmatpush2.msra.mxu0 0.0
        %1006 = vmatprep.mubr.f32.mxu0 0.0
        %1007 = vmatmul.mubr.f32.gmra.mxu0 %v930
        %v1008 = vpop.f32.mrf.mxu0
        %v1009 = vadd.f32 0.0, %v1008
        %v1010 = vpop.f32.mrf.mxu0
        %1011 = vmatprep.mubr.f32.mxu0 0.0
        %1012 = vmatmul.mubr.f32.gmra.mxu0 %v933
        %v1013 = vpop.f32.mrf.mxu0
        %v1014 = vadd.f32 0.0, %v1013
        %v1015 = vpop.f32.mrf.mxu0
        %1016 = vmatprep.mubr.f32.mxu0 0.0
        %1017 = vmatmul.mubr.f32.gmra.mxu0 %v936
        %v1018 = vpop.f32.mrf.mxu0
        %v1019 = vadd.f32 0.0, %v1018
        %v1020 = vpop.f32.mrf.mxu0
        %1021 = vdwg.mxu0
        %v1022 = vmul.f32 %v1009, %v775
        %v1023 = vmul.f32 %v1014, %v780
        %v1024 = vmul.f32 %v1019, %v785
        %v1025 = vsel %vm489, %v1022, 0.0
        %v1026 = vsel %vm489, %v1023, 0.0
        %v1027 = vadd.f32 %v1025, %v1026
        %v1028 = vsel %vm502, %v1024, 0.0
        %v1029 = vadd.f32 %v1027, %v1028
        %v1030 = vrot.slane %v1029, 4
        %v1031 = vadd.f32 %v1029, %v1030
        %v1032 = vrot.slane %v1031, 2
        %v1033 = vadd.f32 %v1031, %v1032
        %v1034 = vrot.slane %v1033, 1
        %v1035 = vadd.f32 %v1033, %v1034
        %v1036 = vld [vmem:[#allocation11] sm:$0xff]
        %v1037 = vld [vmem:[#allocation11 + $0x8] sm:$0xff]
        %v1038 = vld [vmem:[#allocation11 + $0x10] sm:$0xff]
        %v1039 = vld [vmem:[#allocation11 + $0x18] sm:$0xff]
        %v1040 = vld [vmem:[%s9] sm:$0x1]
        %v1042 = vsel %vm489, %v1035, 0
        %1044 = vmatprep.subr.mxu0 0.0
        %1045 = vmatpush1.msra.mxu0 0.0
        %1046 = vmatprep.subr.mxu0 0.0
        %1047 = vmatpush1.msra.mxu0 0.0
        %1048 = vmatprep.subr.mxu0 0.0
        %1049 = vmatpush1.msra.mxu0 0.0
        %1050 = vmatprep.subr.mxu0 0.0
        %1051 = vmatpush1.msra.mxu0 0.0
        %1052 = vmatprep.subr.mxu0 0.0
        %1053 = vmatpush1.msra.mxu0 0.0
        %1054 = vmatprep.subr.mxu0 0.0
        %1055 = vmatpush1.msra.mxu0 0.0
        %1056 = vmatprep.subr.mxu0 0.0
        %1057 = vmatpush1.msra.mxu0 0.0
        %1058 = vmatprep.subr.mxu0 0.0
        %1059 = vmatpush1.msra.mxu0 0.0
        %1060 = vmatprep.subr.mxu0 0.0
        %1061 = vmatpush1.msra.mxu0 0.0
        %1062 = vmatprep.subr.mxu0 0.0
        %1063 = vmatpush1.msra.mxu0 0.0
        %1064 = vmatprep.subr.mxu0 0.0
        %1065 = vmatpush1.msra.mxu0 0.0
        %1066 = vmatprep.subr.mxu0 0.0
        %1067 = vmatpush1.msra.mxu0 0.0
        %1068 = vmatprep.subr.mxu0 0.0
        %1069 = vmatpush1.msra.mxu0 %v1039
        %1070 = vmatprep.subr.mxu0 0.0
        %1071 = vmatpush1.msra.mxu0 %v1038
        %1072 = vmatprep.subr.mxu0 0.0
        %1073 = vmatpush1.msra.mxu0 %v1037
        %1074 = vmatprep.subr.mxu0 0.0
        %1075 = vmatpush1.msra.mxu0 %v1036
        %1076 = vmatprep.subr.mxu0 0.0
        %1077 = vmatpush2.msra.mxu0 0.0
        %1078 = vmatprep.subr.mxu0 0.0
        %1079 = vmatpush2.msra.mxu0 0.0
        %1080 = vmatprep.subr.mxu0 0.0
        %1081 = vmatpush2.msra.mxu0 0.0
        %1082 = vmatprep.subr.mxu0 0.0
        %1083 = vmatpush2.msra.mxu0 0.0
        %1084 = vmatprep.subr.mxu0 0.0
        %1085 = vmatpush2.msra.mxu0 0.0
        %1086 = vmatprep.subr.mxu0 0.0
        %1087 = vmatpush2.msra.mxu0 0.0
        %1088 = vmatprep.subr.mxu0 0.0
        %1089 = vmatpush2.msra.mxu0 0.0
        %1090 = vmatprep.subr.mxu0 0.0
        %1091 = vmatpush2.msra.mxu0 0.0
        %1092 = vmatprep.subr.mxu0 0.0
        %1093 = vmatpush2.msra.mxu0 0.0
        %1094 = vmatprep.subr.mxu0 0.0
        %1095 = vmatpush2.msra.mxu0 0.0
        %1096 = vmatprep.subr.mxu0 0.0
        %1097 = vmatpush2.msra.mxu0 0.0
        %1098 = vmatprep.subr.mxu0 0.0
        %1099 = vmatpush2.msra.mxu0 0.0
        %1100 = vmatprep.subr.mxu0 0.0
        %1101 = vmatpush2.msra.mxu0 0.0
        %1102 = vmatprep.subr.mxu0 0.0
        %1103 = vmatpush2.msra.mxu0 0.0
        %1104 = vmatprep.subr.mxu0 0.0
        %1105 = vmatpush2.msra.mxu0 0.0
        %1106 = vmatprep.subr.mxu0 0.0
        %1107 = vmatpush2.msra.mxu0 0.0
        %1108 = vmatprep.mubr.f32.mxu0 0.0
        %1109 = vmatmul.mubr.f32.gmra.mxu0 %v1042
        %v1110 = vpop.f32.mrf.mxu0
        %v1111 = vadd.f32 %v1040, %v1110
        %v1112 = vpop.f32.mrf.mxu0
        %1113 = vdwg.mxu0
        %vm1114 = vcmask 516096
        %1115 = vst.msk [vmem:[%s478] sm:$0x1] %vm1114, %v1111
        %s1116 = sand.u32 %s294, 1
        %s1117 = scalar_lea.sflag [#allocation5], %s1116
        %s1118 = sand.u32 %s294, 1
        %s1119 = scalar_lea.vmem [#allocation12], %s1118
        // Predicated region
        $region89: #{tpu_custom_call.1} parent=67 // pred_check
          %p1120 = pneg %p304
        $region90: #{tpu_custom_call.1} parent=67 // pred_check_branch
          %1122 = sbr.rel (%p1120) target = $region92
        $region91: #{tpu_custom_call.1} parent=67 // pred_region
          %s1124 = ssub.s32 16, 16
          %1125 = vsyncadd %s1117, %s1124
          %s1126 = smul.addr %s29, 16
          %s1127 = scalar_lea.hbm %s12, %s1126
          %s1129 = sshll.u32 %s1119, 4
          %s1130 = int_to_ptr.vmem [resolvable:$true] %s1129
          %1132 = dma.vmem_to_hbm [thread:$0]  %s1130, 16, %s1127, %s1117
        $region92: #{tpu_custom_call.1} parent=67 // pred_fallthru
          _
      $region68: #{tpu_custom_call.1} parent=5 // pred_fallthru
        _
      %p1133 = scmp.le.s32.totalorder 2, %s24
      // Predicated region
      $region93: #{tpu_custom_call.1} parent=5 // pred_check
        %p1134 = pneg %p1133
      $region94: #{tpu_custom_call.1} parent=5 // pred_check_branch
        %1136 = sbr.rel (%p1134) target = $region96
      $region95: #{tpu_custom_call.1} parent=5 // pred_region
        %s1137 = ssub.s32 %s24, 2
        // Predicated region
        $region97: #{tpu_custom_call.1} parent=95 // pred_check
          %p1138 = pneg %p310
        $region98: #{tpu_custom_call.1} parent=95 // pred_check_branch
          %1140 = sbr.rel (%p1138) target = $region100
        $region99: #{tpu_custom_call.1} parent=95 // pred_region
          %s1141 = sand.u32 %s295, 1
          %s1142 = scalar_lea.sflag [#allocation5], %s1141
          %s1143 = sand.u32 %s295, 1
          %s1144 = scalar_lea.vmem [#allocation12], %s1143
          %1145 = dma.done %s1142, 16
        $region100: #{tpu_custom_call.1} parent=95 // pred_fallthru
          _
      $region96: #{tpu_custom_call.1} parent=5 // pred_fallthru
        _
    $region6: #{tpu_custom_call.1} parent=1 // loop_footer
      %s28 = sadd.s32 1, %s24
    $region7: #{tpu_custom_call.1} parent=1 // loop_footer_branch
      %23 = sbr.rel target = $region3
    $region8: #{tpu_custom_call.1} parent=1 // loop_exit
      _
    %1146 = vsyncpa [#allocation4], 1
    %s1147 = scalar_lea.sflag [#allocation4], 1
    %1148 = vsyncpa %s1147, 1
    %1149 = vsyncpa [#allocation7], 1
    %1150 = vsyncpa [#allocation10], 1
    %1151 = vsyncpa [#allocation5], 1
    %s1152 = scalar_lea.sflag [#allocation5], 1
    %1153 = vsyncpa %s1152, 1

</llo_original>
